<compile_context>
chip_gen: v6e
topology: v6e:2x2x1
jax: 0.10.0
libtpu: 0.0.40
codegen_flags: <defaults>
</compile_context>

<pallas_src>
import numpy as np
import jax
import jax.numpy as jnp
from jax.experimental import pallas as pl
from jax.experimental.pallas import tpu as pltpu

SIZES = (1, 3, 6, 8)
L = sum(s * s for s in SIZES)  # 110
L_PAD = 128                    # lane-dense output width

_PMAT_CACHE = {}


def _round_up(x, m):
    return ((x + m - 1) // m) * m


def _build_pool_matrix(h, w, sizes, dtype=np.float32):
    """Pooling matrix P: (h*w, L). Matches torch AdaptiveAvgPool2d bin rules."""
    cols = []
    for s in sizes:
        for oi in range(s):
            h0 = (oi * h) // s
            h1 = -((-(oi + 1) * h) // s)  # ceil((oi+1)*h/s)
            for oj in range(s):
                w0 = (oj * w) // s
                w1 = -((-(oj + 1) * w) // s)
                m = np.zeros((h, w), dtype=dtype)
                m[h0:h1, w0:w1] = 1.0 / ((h1 - h0) * (w1 - w0))
                cols.append(m.reshape(-1))
    return np.stack(cols, axis=1)  # (h*w, L)


def _get_pool_matrix(h, w, dtype):
    """Cached, zero-padded (h*w, L_PAD) pooling matrix in the input dtype."""
    key = (h, w, jnp.dtype(dtype).name)
    if key not in _PMAT_CACHE:
        p = _build_pool_matrix(h, w, SIZES, dtype=np.float32)        # (h*w, 110)
        p = np.pad(p, ((0, 0), (0, L_PAD - p.shape[1])))             # (h*w, 128)
        _PMAT_CACHE[key] = jnp.asarray(p).astype(dtype)
    return _PMAT_CACHE[key]


def _vmem_budgets():
    """Returns (buffer_budget_bytes, vmem_limit_bytes), generation-aware."""
    phys = None
    try:
        info = pltpu.get_tpu_info()
        phys = getattr(info, "vmem_capacity_bytes", None)
    except Exception:  # introspection failure -> conservative defaults
        phys = None
    if phys is not None and phys >= 128 * 1024 * 1024:
        # v5e / v6e: 128 MiB physical VMEM per TensorCore.
        return 56 * 1024 * 1024, 96 * 1024 * 1024
    # v7x (64 MiB per TC) or unknown: stay conservative.
    return 28 * 1024 * 1024, 48 * 1024 * 1024


def _psp_kernel(x_ref, p_ref, o_ref):
    # x_ref: (TM, h*w) streamed row tile; p_ref: (h*w, 128) VMEM-resident
    # (constant index_map); o_ref: (TM, 128) lane-dense output tile.
    o_ref[...] = jnp.dot(
        x_ref[...], p_ref[...], preferred_element_type=jnp.float32
    ).astype(o_ref.dtype)


def psp_module_lane_dense(feats):
    """feats: (n, c, h, w) -> (n, c, L_PAD). Columns [L:] are zero padding."""
    n, c, h, w = feats.shape
    hw = h * w
    rows = n * c
    pmat = _get_pool_matrix(h, w, feats.dtype)
    itemsize = jnp.dtype(feats.dtype).itemsize

    buf_budget, vmem_limit = _vmem_budgets()
    # Pipeline buffers: x double-buffer + out double-buffer + P double-buffer
    # (P's constant index_map means it is DMA'd once, but both buffers exist).
    p_bytes = 2 * hw * L_PAD * itemsize
    per_row = 2 * hw * itemsize + 2 * L_PAD * itemsize
    avail = max(buf_budget - p_bytes, 8 * per_row)
    tm = min(avail // per_row, _round_up(rows, 8))
    tm = max(8, (tm // 8) * 8)

    # No host-side padding: partial last block is masked by Pallas. Safe because
    # the matmul is row-independent (padded/garbage rows only reach masked
    # output rows).
    grid = (pl.cdiv(rows, tm),)
    x2d = feats.reshape(rows, hw)

    cost = pl.CostEstimate(
        flops=2 * rows * hw * L_PAD,
        transcendentals=0,
        bytes_accessed=(rows * hw * itemsize        # x read
                        + hw * L_PAD * itemsize     # P read (once)
                        + rows * L_PAD * itemsize), # out write
    )

    out2d = pl.pallas_call(
        _psp_kernel,
        out_shape=jax.ShapeDtypeStruct((rows, L_PAD), feats.dtype),
        grid=grid,
        in_specs=[
            pl.BlockSpec((tm, hw), lambda i: (i, 0)),      # streamed row tiles
            pl.BlockSpec((hw, L_PAD), lambda i: (0, 0)),   # P: same block -> resident
        ],
        out_specs=pl.BlockSpec((tm, L_PAD), lambda i: (i, 0)),
        compiler_params=pltpu.CompilerParams(
            dimension_semantics=("parallel",),
            vmem_limit_bytes=vmem_limit,
        ),
        cost_estimate=cost,
    )(x2d, pmat)

    return out2d.reshape(n, c, L_PAD)


def psp_module(feats):
    """Exact PyTorch PSPModule forward: (n, c, h, w) -> (n, c, 110)."""
    # The 110-col slice is not lane-aligned; keep it out of the kernel and let
    # consumers that can work with the lane-dense layout call
    # psp_module_lane_dense() directly to skip this pass entirely.
    return psp_module_lane_dense(feats)[..., :L]


def _reference(feats):
    """Pure numpy reference of PyTorch semantics (adaptive avg pool + concat)."""
    feats = np.asarray(feats, dtype=np.float32)
    n, c, h, w = feats.shape
    outs = []
    for s in SIZES:
        pooled = np.zeros((n, c, s, s), dtype=np.float32)
        for oi in range(s):
            h0 = (oi * h) // s
            h1 = -((-(oi + 1) * h) // s)
            for oj in range(s):
                w0 = (oj * w) // s
                w1 = -((-(oj + 1) * w) // s)
                pooled[:, :, oi, oj] = feats[:, :, h0:h1, w0:w1].mean(axis=(2, 3))
        outs.append(pooled.reshape(n, c, -1))
    return np.concatenate(outs, axis=-1)


if __name__ == "__main__":
    key = jax.random.PRNGKey(0)

    # Test 1: toy shape from the spec (rows divisible by 8, power-of-two hw).
    n, c, h, w = 2, 4, 16, 16
    feats = jax.random.normal(key, (n, c, h, w), dtype=jnp.float32)
    out = jax.block_until_ready(psp_module(feats))
    assert out.shape == (n, c, L), out.shape
    np.testing.assert_allclose(np.asarray(out), _reference(feats), rtol=1e-5, atol=1e-5)

    # Test 2: non-divisible n*c (partial last block, no host pad) and
    # non-128-aligned h*w.
    k2 = jax.random.PRNGKey(1)
    n2, c2, h2, w2 = 3, 5, 10, 12
    feats2 = jax.random.normal(k2, (n2, c2, h2, w2), dtype=jnp.float32)
    out2 = jax.block_until_ready(psp_module(feats2))
    assert out2.shape == (n2, c2, L), out2.shape
    np.testing.assert_allclose(np.asarray(out2), _reference(feats2), rtol=1e-5, atol=1e-5)

    # Test 3: bf16 input exercises the dtype-matched pooling matrix path.
    k3 = jax.random.PRNGKey(2)
    feats3 = jax.random.normal(k3, (2, 4, 16, 16), dtype=jnp.bfloat16)
    out3 = jax.block_until_ready(psp_module(feats3))
    assert out3.shape == (2, 4, L), out3.shape
    np.testing.assert_allclose(np.asarray(out3, dtype=np.float32),
                               _reference(np.asarray(feats3, dtype=np.float32)),
                               rtol=2e-2, atol=2e-2)

    print("KERNEL_OK")
</pallas_src>

<mosaic_0001>
module attributes {stable_mosaic.version = 11 : i64} {
  func.func @_psp_kernel(%arg0: i32, %arg1: memref<8x256xf32, #tpu.memory_space<vmem>>, %arg2: memref<256x128xf32, #tpu.memory_space<vmem>>, %arg3: memref<8x128xf32, #tpu.memory_space<vmem>>) attributes {dimension_semantics = [#tpu.dimension_semantics<parallel>], iteration_bounds = array<i64: 1>, scalar_prefetch = 0 : i64, scratch_operands = 0 : i64, tpu.core_type = #tpu.core_type<tc>, window_params = [{transform_indices = @transform_0, window_bounds = array<i64: 8, 256>}, {pipeline_mode = #tpu.pipeline_mode<synchronous>, transform_indices = @transform_1, window_bounds = array<i64: 256, 128>}, {transform_indices = @transform_2, window_bounds = array<i64: 8, 128>}]} {
    %c0 = arith.constant 0 : index
    %c0_0 = arith.constant 0 : index
    %0 = vector.load %arg1[%c0, %c0_0] : memref<8x256xf32, #tpu.memory_space<vmem>>, vector<8x256xf32>
    %c0_1 = arith.constant 0 : index
    %c0_2 = arith.constant 0 : index
    %1 = vector.load %arg2[%c0_1, %c0_2] : memref<256x128xf32, #tpu.memory_space<vmem>>, vector<256x128xf32>
    %cst = arith.constant dense<0.000000e+00> : vector<8x128xf32>
    %2 = tpu.matmul %0, %1, %cst {dimension_numbers = #tpu.dot_dimension_numbers<[1], [0], [0], [1], [0, 0, 1, 1], [], []>} : vector<8x256xf32>, vector<256x128xf32>, vector<8x128xf32> -> vector<8x128xf32>
    %c0_3 = arith.constant 0 : index
    %c0_4 = arith.constant 0 : index
    %3 = vector.load %arg3[%c0_3, %c0_4] : memref<8x128xf32, #tpu.memory_space<vmem>>, vector<8x128xf32>
    tpu.vector_store %arg3[%c0_3, %c0_4], %2 {strides = array<i32>} : memref<8x128xf32, #tpu.memory_space<vmem>>, vector<8x128xf32>,
    return
  }
  func.func @transform_0(%arg0: i32) -> (i32, i32) {
    %c0_i32 = arith.constant 0 : i32
    %c0_i32_0 = arith.constant 0 : i32
    return %arg0, %c0_i32 : i32, i32
  }
  func.func @transform_1(%arg0: i32) -> (i32, i32) {
    %c0_i32 = arith.constant 0 : i32
    %c0_i32_0 = arith.constant 0 : i32
    %c0_i32_1 = arith.constant 0 : i32
    return %c0_i32, %c0_i32_0 : i32, i32
  }
  func.func @transform_2(%arg0: i32) -> (i32, i32) {
    %c0_i32 = arith.constant 0 : i32
    %c0_i32_0 = arith.constant 0 : i32
    return %arg0, %c0_i32 : i32, i32
  }
}

</mosaic_0001>

<llo_original>
// kernel: tpu_custom_call.1
$region0: #{tpu_custom_call.1}
  #allocation0 [shape = 'u32[]', space=smem, size = 0x4, offset = 0x4, fixed_abs, tag = 'smem constant byte address 0x4 - core index']
  #allocation1 [shape = 'u32[144,128]{1,0:T(1,128)}', space=vmem, size = 0x12000, scoped, tag = 'internal scratch']
  %s0 = inlined_call_operand.hbm [shape: f32[8,256], index: 0, kind: input, shape index: {}]
  %s1 = inlined_call_operand.hbm [shape: f32[256,128], index: 1, kind: input, shape index: {}]
  %s2 = inlined_call_operand.hbm [shape: f32[8,128], index: 2, kind: output, shape index: {}]
  %s3 = sld [smem:[#allocation0]]
  $region26: #{tpu_custom_call.1} parent=0
    _
  %s5 = ssub.s32 1, %s3
  %s6 = scalar_select 0, %s5, %s3
  $region1: #{tpu_custom_call.1} parent=0
    #allocation2 [shape = 'u8[8192]{0}', space=vmem, size = 0x2000, scoped, tag = 'input window, operand 0, single buffered']
    #allocation3 [shape = 's32[1]{0}', space=sflag, size = 0x4, scoped, tag = 'scoped memory for tpu_custom_call.1']
    #allocation4 [shape = 's32[1]{0}', space=sflag, size = 0x4, scoped, tag = 'scoped memory for tpu_custom_call.1']
    #allocation5 [shape = 'u8[131072]{0}', space=vmem, size = 0x20000, scoped, tag = 'input window, operand 1, single buffered']
    #allocation6 [shape = 's32[1]{0}', space=sflag, size = 0x4, scoped, tag = 'scoped memory for tpu_custom_call.1']
    #allocation7 [shape = 'u8[4096]{0}', space=vmem, size = 0x1000, scoped, tag = 'output window, operand 0, single buffered']
    %7 = vsyncpa [#allocation3], 0
    %8 = vsyncpa [#allocation6], 0
    %9 = vsyncpa [#allocation4], 0
    // Predicated region
    $region2: #{tpu_custom_call.1} parent=1 // pred_check
      _
    $region3: #{tpu_custom_call.1} parent=1 // pred_check_branch
      %11 = sbr.rel (0) target = $region5
    $region4: #{tpu_custom_call.1} parent=1 // pred_region
      %s13 = ssub.s32 256, 256
      %14 = vsyncadd [#allocation3], %s13
      %s16 = sshll.u32 [#allocation2], 4
      %s17 = int_to_ptr.vmem [resolvable:$true] %s16
      %19 = dma.hbm_to_vmem [thread:$0]  %s0, 256, %s17, [#allocation3]
    $region5: #{tpu_custom_call.1} parent=1 // pred_fallthru
      _
    // Predicated region
    $region6: #{tpu_custom_call.1} parent=1 // pred_check
      _
    $region7: #{tpu_custom_call.1} parent=1 // pred_check_branch
      %21 = sbr.rel (0) target = $region9
    $region8: #{tpu_custom_call.1} parent=1 // pred_region
      %s23 = ssub.s32 4096, 4096
      %24 = vsyncadd [#allocation6], %s23
      %s25 = sshll.u32 [#allocation5], 4
      %s26 = int_to_ptr.vmem [resolvable:$true] %s25
      %31 = dma.hbm_to_vmem [thread:$0]  %s1, 4096, %s26, [#allocation6], 128, 128, 8
    $region9: #{tpu_custom_call.1} parent=1 // pred_fallthru
      _
    // Predicated region
    $region10: #{tpu_custom_call.1} parent=1 // pred_check
      _
    $region11: #{tpu_custom_call.1} parent=1 // pred_check_branch
      %33 = sbr.rel (0) target = $region13
    $region12: #{tpu_custom_call.1} parent=1 // pred_region
      %34 = dma.done [#allocation3], 256
    $region13: #{tpu_custom_call.1} parent=1 // pred_fallthru
      _
    // Predicated region
    $region14: #{tpu_custom_call.1} parent=1 // pred_check
      _
    $region15: #{tpu_custom_call.1} parent=1 // pred_check_branch
      %36 = sbr.rel (0) target = $region17
    $region16: #{tpu_custom_call.1} parent=1 // pred_region
      %37 = dma.done [#allocation6], 4096
    $region17: #{tpu_custom_call.1} parent=1 // pred_fallthru
      _
    %v38 = vld [vmem:[#allocation2] sm:$0xff]
    %v39 = vld [vmem:[#allocation2 + $0x8] sm:$0xff]
    %v40 = vld [vmem:[#allocation5] sm:$0xff]
    %v41 = vld [vmem:[#allocation5 + $0x8] sm:$0xff]
    %v42 = vld [vmem:[#allocation5 + $0x10] sm:$0xff]
    %v43 = vld [vmem:[#allocation5 + $0x18] sm:$0xff]
    %v44 = vld [vmem:[#allocation5 + $0x20] sm:$0xff]
    %v45 = vld [vmem:[#allocation5 + $0x28] sm:$0xff]
    %v46 = vld [vmem:[#allocation5 + $0x30] sm:$0xff]
    %v47 = vld [vmem:[#allocation5 + $0x38] sm:$0xff]
    %v48 = vld [vmem:[#allocation5 + $0x40] sm:$0xff]
    %v49 = vld [vmem:[#allocation5 + $0x48] sm:$0xff]
    %v50 = vld [vmem:[#allocation5 + $0x50] sm:$0xff]
    %v51 = vld [vmem:[#allocation5 + $0x58] sm:$0xff]
    %v52 = vld [vmem:[#allocation5 + $0x60] sm:$0xff]
    %v53 = vld [vmem:[#allocation5 + $0x68] sm:$0xff]
    %v54 = vld [vmem:[#allocation5 + $0x70] sm:$0xff]
    %v55 = vld [vmem:[#allocation5 + $0x78] sm:$0xff]
    %v56 = vld [vmem:[#allocation5 + $0x80] sm:$0xff]
    %v57 = vld [vmem:[#allocation5 + $0x88] sm:$0xff]
    %v58 = vld [vmem:[#allocation5 + $0x90] sm:$0xff]
    %v59 = vld [vmem:[#allocation5 + $0x98] sm:$0xff]
    %v60 = vld [vmem:[#allocation5 + $0xa0] sm:$0xff]
    %v61 = vld [vmem:[#allocation5 + $0xa8] sm:$0xff]
    %v62 = vld [vmem:[#allocation5 + $0xb0] sm:$0xff]
    %v63 = vld [vmem:[#allocation5 + $0xb8] sm:$0xff]
    %v64 = vld [vmem:[#allocation5 + $0xc0] sm:$0xff]
    %v65 = vld [vmem:[#allocation5 + $0xc8] sm:$0xff]
    %v66 = vld [vmem:[#allocation5 + $0xd0] sm:$0xff]
    %v67 = vld [vmem:[#allocation5 + $0xd8] sm:$0xff]
    %v68 = vld [vmem:[#allocation5 + $0xe0] sm:$0xff]
    %v69 = vld [vmem:[#allocation5 + $0xe8] sm:$0xff]
    %v70 = vld [vmem:[#allocation5 + $0xf0] sm:$0xff]
    %v71 = vld [vmem:[#allocation5 + $0xf8] sm:$0xff]
    %72 = vmatprep.subr.mxu0 0.0
    %73 = vmatpush1.msra.mxu0 %v55
    %74 = vmatprep.subr.mxu0 0.0
    %75 = vmatpush1.msra.mxu0 %v54
    %76 = vmatprep.subr.mxu0 0.0
    %77 = vmatpush1.msra.mxu0 %v53
    %78 = vmatprep.subr.mxu0 0.0
    %79 = vmatpush1.msra.mxu0 %v52
    %80 = vmatprep.subr.mxu0 0.0
    %81 = vmatpush1.msra.mxu0 %v51
    %82 = vmatprep.subr.mxu0 0.0
    %83 = vmatpush1.msra.mxu0 %v50
    %84 = vmatprep.subr.mxu0 0.0
    %85 = vmatpush1.msra.mxu0 %v49
    %86 = vmatprep.subr.mxu0 0.0
    %87 = vmatpush1.msra.mxu0 %v48
    %88 = vmatprep.subr.mxu0 0.0
    %89 = vmatpush1.msra.mxu0 %v47
    %90 = vmatprep.subr.mxu0 0.0
    %91 = vmatpush1.msra.mxu0 %v46
    %92 = vmatprep.subr.mxu0 0.0
    %93 = vmatpush1.msra.mxu0 %v45
    %94 = vmatprep.subr.mxu0 0.0
    %95 = vmatpush1.msra.mxu0 %v44
    %96 = vmatprep.subr.mxu0 0.0
    %97 = vmatpush1.msra.mxu0 %v43
    %98 = vmatprep.subr.mxu0 0.0
    %99 = vmatpush1.msra.mxu0 %v42
    %100 = vmatprep.subr.mxu0 0.0
    %101 = vmatpush1.msra.mxu0 %v41
    %102 = vmatprep.subr.mxu0 0.0
    %103 = vmatpush1.msra.mxu0 %v40
    %104 = vmatprep.subr.mxu0 0.0
    %105 = vmatpush2.msra.mxu0 %v71
    %106 = vmatprep.subr.mxu0 0.0
    %107 = vmatpush2.msra.mxu0 %v70
    %108 = vmatprep.subr.mxu0 0.0
    %109 = vmatpush2.msra.mxu0 %v69
    %110 = vmatprep.subr.mxu0 0.0
    %111 = vmatpush2.msra.mxu0 %v68
    %112 = vmatprep.subr.mxu0 0.0
    %113 = vmatpush2.msra.mxu0 %v67
    %114 = vmatprep.subr.mxu0 0.0
    %115 = vmatpush2.msra.mxu0 %v66
    %116 = vmatprep.subr.mxu0 0.0
    %117 = vmatpush2.msra.mxu0 %v65
    %118 = vmatprep.subr.mxu0 0.0
    %119 = vmatpush2.msra.mxu0 %v64
    %120 = vmatprep.subr.mxu0 0.0
    %121 = vmatpush2.msra.mxu0 %v63
    %122 = vmatprep.subr.mxu0 0.0
    %123 = vmatpush2.msra.mxu0 %v62
    %124 = vmatprep.subr.mxu0 0.0
    %125 = vmatpush2.msra.mxu0 %v61
    %126 = vmatprep.subr.mxu0 0.0
    %127 = vmatpush2.msra.mxu0 %v60
    %128 = vmatprep.subr.mxu0 0.0
    %129 = vmatpush2.msra.mxu0 %v59
    %130 = vmatprep.subr.mxu0 0.0
    %131 = vmatpush2.msra.mxu0 %v58
    %132 = vmatprep.subr.mxu0 0.0
    %133 = vmatpush2.msra.mxu0 %v57
    %134 = vmatprep.subr.mxu0 0.0
    %135 = vmatpush2.msra.mxu0 %v56
    %136 = vmatprep.mubr.f32.mxu0 %v39
    %137 = vmatmul.mubr.f32.gmra.mxu0 %v38
    %v138 = vpop.f32.mrf.mxu0
    %v139 = vadd.f32 0.0, %v138
    %v140 = vpop.f32.mrf.mxu0
    %141 = vdwg.mxu0
    %142 = vst [vmem:[#allocation7] sm:$0xff] %v139
    // Predicated region
    $region18: #{tpu_custom_call.1} parent=1 // pred_check
      _
    $region19: #{tpu_custom_call.1} parent=1 // pred_check_branch
      %144 = sbr.rel (0) target = $region21
    $region20: #{tpu_custom_call.1} parent=1 // pred_region
      %s146 = ssub.s32 128, 128
      %147 = vsyncadd [#allocation4], %s146
      %s149 = sshll.u32 [#allocation7], 4
      %s150 = int_to_ptr.vmem [resolvable:$true] %s149
      %152 = dma.vmem_to_hbm [thread:$0]  %s150, 128, %s2, [#allocation4]
    $region21: #{tpu_custom_call.1} parent=1 // pred_fallthru
      _
    // Predicated region
    $region22: #{tpu_custom_call.1} parent=1 // pred_check
      _
    $region23: #{tpu_custom_call.1} parent=1 // pred_check_branch
      %154 = sbr.rel (0) target = $region25
    $region24: #{tpu_custom_call.1} parent=1 // pred_region
      %155 = dma.done [#allocation4], 128
    $region25: #{tpu_custom_call.1} parent=1 // pred_fallthru
      _
    %156 = vsyncpa [#allocation3], 1
    %157 = vsyncpa [#allocation6], 1
    %158 = vsyncpa [#allocation4], 1

</llo_original>
